<compile_context>
chip_gen: v6e
topology: v6e:2x2x1
jax: 0.10.0
libtpu: 0.0.40
codegen_flags: <defaults>
</compile_context>

<pallas_src>
import functools

import numpy as np
import jax
import jax.numpy as jnp
from jax.experimental import pallas as pl
from jax.experimental.pallas import tpu as pltpu


@functools.lru_cache(maxsize=None)
def _bilinear_matrix(n_in: int, n_out: int) -> np.ndarray:
    """1-D bilinear interpolation matrix matching F.interpolate(align_corners=False)."""
    m = np.zeros((n_out, n_in), dtype=np.float32)
    scale = n_in / n_out
    for i in range(n_out):
        src = max((i + 0.5) * scale - 0.5, 0.0)
        i0 = min(int(np.floor(src)), n_in - 1)
        i1 = min(i0 + 1, n_in - 1)
        w1 = src - float(i0)
        m[i, i0] += 1.0 - w1
        m[i, i1] += w1
    return m


def _vmem_capacity_bytes() -> int:
    """Physical VMEM of the attached TPU generation (conservative fallback)."""
    try:
        cap = getattr(pltpu.get_tpu_info(), "vmem_capacity_bytes", None)
        if cap:
            return int(cap)
    except Exception:
        pass
    return 64 * 1024 * 1024          # v7x per-TensorCore VMEM (smallest current part)


def _make_kernel(levels, H, W, tbc, bc_valid, needs_mask):
    """Build the fused multi-level loss kernel.

    levels: tuple of (is_identity, apply_clamp, h, w, scaled_weight) per level.
    """
    n_levels = len(levels)
    n_ops = sum(1 for lv in levels if not lv[0])

    def kernel(*refs):
        gt_ref = refs[0]                               # (tbc,H,W) or (tbc,HW), compute dtype
        pred_refs = refs[1:1 + n_levels]               # per level, compute dtype
        pos = 1 + n_levels
        rt_cat_ref = refs[pos] if n_ops else None      # (W, sum_w)
        pos += 1 if n_ops else 0
        lt_refs = refs[pos:pos + n_ops]                # (H, h_l) per non-identity level
        out_ref = refs[pos + n_ops]                    # (1, 1) f32, SMEM (per-block partial)

        gt_c = gt_ref[...]

        valid = None
        if needs_mask:
            # Ragged last block: mask rows past the true B*C (no host padding).
            rows = jax.lax.broadcasted_iota(jnp.int32, (tbc, 1), 0)
            valid = (pl.program_id(0) * tbc + rows) < bc_valid     # (tbc, 1) bool
            if gt_c.ndim == 3:
                valid = valid.reshape(tbc, 1, 1)

        t_all = None
        if n_ops:
            # Fused W-contraction for all levels: one MXU matmul per block.
            g2 = gt_c.reshape(tbc * H, W)
            t_all = jnp.dot(g2, rt_cat_ref[...],
                            preferred_element_type=jnp.float32)    # (tbc*H, sum_w) f32

        partial = jnp.float32(0.0)
        op_i = 0
        col = 0
        for lvl, (is_identity, apply_clamp, h_l, w_l, sw) in enumerate(levels):
            pred = pred_refs[lvl][...].astype(jnp.float32)          # (tbc, h, w)
            if is_identity:
                # F.interpolate with scale 1 is the identity map.
                down = gt_c.astype(jnp.float32)
            else:
                t_l = t_all[:, col:col + w_l].reshape(tbc, H, w_l)
                col += w_l
                lT = lt_refs[op_i][...].astype(jnp.float32)         # (H, h_l)
                op_i += 1
                # H-contraction; natural dot_general output order is (b, w_l, h_l).
                down_t = jnp.einsum('bhk,ho->bko', t_l, lT,
                                    preferred_element_type=jnp.float32)
                # Small XLU transpose of the downsampled result only (replaces the
                # old host-side materialized swapaxes of every pred).
                down = jnp.swapaxes(down_t, 1, 2)                   # (tbc, h_l, w_l)
            if apply_clamp:
                down = jnp.clip(down, 0.0, 1.0)                     # torch.clamp(0, 1)
            diff = jnp.abs(pred - down)
            if needs_mask:
                diff = jnp.where(valid, diff, 0.0)
            partial = partial + jnp.float32(sw) * jnp.sum(diff)

        out_ref[0, 0] = partial                                     # per-block partial sum

    return kernel


def transmission_loss(predicted_trans_pyramid, gt_trans,
                      weights=(0.6, 0.8, 1.0, 1.0),
                      compute_dtype=jnp.float32,
                      row_block=None):
    """Pallas equivalent of Transmission_Loss.forward.

    compute_dtype: feed dtype for gt, preds and the bilinear operators
                   (f32 = exact torch semantics; bf16 halves HBM traffic on
                   v6e/v7x at ~1e-2 relative error; accumulation is always f32).
    row_block:     optional override of the B*C tile size (else VMEM-budgeted).
    """
    is_pyramid = isinstance(predicted_trans_pyramid, (list, tuple))
    preds = list(predicted_trans_pyramid) if is_pyramid else [predicted_trans_pyramid]

    B, C, H, W = gt_trans.shape
    BC = B * C
    cd = jnp.dtype(compute_dtype)
    cd_item = cd.itemsize

    # ---- per-level metadata + tiny separable operators -----------------------
    levels = []                 # (is_identity, apply_clamp, h, w, scaled_weight)
    rT_cols = []                # numpy (W, w_l) column blocks for the fused rT_cat
    lT_list = []                # numpy (H, h_l) per non-identity level
    preds_fed = []
    sum_w = 0
    flops = 0
    for idx, pred in enumerate(preds):
        _, _, h, w = pred.shape
        if not is_pyramid:
            assert h == H and w == W, "non-pyramid path requires matching shapes"
        is_identity = (h == H) and (w == W)
        apply_clamp = is_pyramid            # torch clamps only on the pyramid path
        wgt = float(weights[idx]) if is_pyramid else 1.0
        levels.append((is_identity, apply_clamp, h, w, wgt / float(BC * h * w)))
        if not is_identity:
            L = _bilinear_matrix(H, h)      # (h, H)
            R = _bilinear_matrix(W, w)      # (w, W)
            rT_cols.append(R.T)             # (W, w)
            lT_list.append(L.T)             # (H, h)
            sum_w += w
            flops += 2 * BC * (H * W * w + H * h * w)
        p = pred.reshape(BC, h, w)          # native layout, no transpose
        if p.dtype != cd:
            p = p.astype(cd)                # stream preds in compute dtype
        preds_fed.append(p)
    levels = tuple(levels)

    gt_fed = gt_trans.reshape(BC, H, W)
    if gt_fed.dtype != cd:
        gt_fed = gt_fed.astype(cd)

    gt_is_2d = False
    if not is_pyramid:
        # Pure element-wise L1: present lane-dense 2D views (free reshape of
        # contiguous arrays) so the last dim fills the 128-lane vregs.
        gt_fed = gt_fed.reshape(BC, H * W)
        preds_fed = [preds_fed[0].reshape(BC, H * W)]
        gt_is_2d = True

    ops = []
    if rT_cols:
        rt_cat = np.concatenate(rT_cols, axis=1)            # (W, sum_w)
        ops.append(jnp.asarray(rt_cat, dtype=cd))
        ops.extend(jnp.asarray(lt, dtype=cd) for lt in lT_list)

    # ---- generation-aware B*C row tiling -------------------------------------
    vmem_cap = _vmem_capacity_bytes()
    sum_hw = sum(lv[2] * lv[3] for lv in levels)
    per_row_stream = cd_item * (H * W + sum_hw)              # streamed, double-buffered
    per_row_tmp = 4 * (H * W + H * sum_w + 2 * sum_hw)       # f32 in-kernel temporaries
    per_row = 2 * per_row_stream + per_row_tmp
    ops_bytes = 2 * sum(int(o.size) * o.dtype.itemsize for o in ops)

    if row_block is None:
        target = int(vmem_cap * 0.65)                        # headroom for compiler scratch
        tbc = max(1, (target - ops_bytes) // max(per_row, 1))
        if tbc >= 8:
            tbc = (tbc // 8) * 8
        tbc = min(tbc, BC)
    else:
        tbc = max(1, min(int(row_block), BC))
    if gt_is_2d and tbc != BC and tbc % 8 != 0:
        # 2D blocks: sublane (second-minor) dim must be a multiple of 8 or full.
        tbc = min(BC, max(8, (tbc // 8) * 8))

    n_blocks = pl.cdiv(BC, tbc)
    needs_mask = (BC % tbc) != 0

    # ---- specs ----------------------------------------------------------------
    if gt_is_2d:
        in_specs = [pl.BlockSpec((tbc, H * W), lambda i: (i, 0))]
    else:
        in_specs = [pl.BlockSpec((tbc, H, W), lambda i: (i, 0, 0))]
    for p in preds_fed:
        if p.ndim == 2:
            in_specs.append(pl.BlockSpec((tbc, p.shape[1]), lambda i: (i, 0)))
        else:
            in_specs.append(pl.BlockSpec((tbc, p.shape[1], p.shape[2]),
                                         lambda i: (i, 0, 0)))
    for o in ops:   # small operators: full-extent, resident across the grid
        in_specs.append(pl.BlockSpec(o.shape, lambda i: (0, 0)))

    out_spec = pl.BlockSpec((1, 1), lambda i: (i, 0),
                            memory_space=pltpu.MemorySpace.SMEM)

    need = tbc * per_row + ops_bytes + (2 << 20)
    vmem_limit = max(need, 32 * 1024 * 1024)
    if need <= vmem_cap:
        vmem_limit = min(vmem_limit, vmem_cap)   # never cap below the actual need

    bytes_accessed = (int(gt_fed.size) * cd_item
                      + sum(int(p.size) * p.dtype.itemsize for p in preds_fed)
                      + sum(int(o.size) * o.dtype.itemsize for o in ops)
                      + 4 * n_blocks)

    kernel = _make_kernel(levels, H, W, tbc, BC, needs_mask)
    partials = pl.pallas_call(
        kernel,
        out_shape=jax.ShapeDtypeStruct((n_blocks, 1), jnp.float32),
        grid_spec=pltpu.PrefetchScalarGridSpec(
            num_scalar_prefetch=0,
            grid=(n_blocks,),
            in_specs=in_specs,
            out_specs=out_spec),
        compiler_params=pltpu.CompilerParams(
            dimension_semantics=("parallel",),   # per-block outputs -> megacore-shardable
            vmem_limit_bytes=int(vmem_limit)),
        cost_estimate=pl.CostEstimate(flops=int(flops), transcendentals=0,
                                      bytes_accessed=int(bytes_accessed)),
    )(gt_fed, *preds_fed, *ops)
    return jnp.sum(partials)


def _reference_numpy(pyramid_or_pred, gt, weights):
    """Pure-numpy reference (same separable-bilinear math) for a sanity check."""
    gt = np.asarray(gt, np.float32)
    if not isinstance(pyramid_or_pred, (list, tuple)):
        return float(np.mean(np.abs(np.asarray(pyramid_or_pred, np.float32) - gt)))
    B, C, H, W = gt.shape
    total = 0.0
    for idx, pred in enumerate(pyramid_or_pred):
        _, _, h, w = pred.shape
        L = _bilinear_matrix(H, h)
        R = _bilinear_matrix(W, w)
        down = np.einsum('oh,bchw,vw->bcov', L, gt, R)
        down = np.clip(down, 0.0, 1.0)
        total += weights[idx] * np.mean(np.abs(np.asarray(pred, np.float32) - down))
    return float(total)


if __name__ == "__main__":
    key = jax.random.PRNGKey(0)
    k_gt, k0, k1, k2, k3, k_gt2, k_p2 = jax.random.split(key, 7)
    weights = (0.6, 0.8, 1.0, 1.0)

    # --- case 1: 4-level pyramid, small shapes (single grid step) -------------
    B, C, H, W = 2, 1, 16, 16
    gt_trans = jax.random.uniform(k_gt, (B, C, H, W), dtype=jnp.float32)
    pyramid = [
        jax.random.uniform(k0, (B, C, 2, 2), dtype=jnp.float32),
        jax.random.uniform(k1, (B, C, 4, 4), dtype=jnp.float32),
        jax.random.uniform(k2, (B, C, 8, 8), dtype=jnp.float32),
        jax.random.uniform(k3, (B, C, 16, 16), dtype=jnp.float32),
    ]
    loss = jax.block_until_ready(transmission_loss(pyramid, gt_trans, weights))
    ref = _reference_numpy(pyramid, gt_trans, weights)
    assert np.allclose(float(loss), ref, atol=1e-4), (float(loss), ref)

    # --- case 2: ragged multi-block grid (BC=16, row_block=6 -> grid=3, masked) -
    B2, C2, H2, W2 = 4, 4, 32, 32
    gt2 = jax.random.uniform(k_gt2, (B2, C2, H2, W2), dtype=jnp.float32)
    kk = jax.random.split(k_p2, 4)
    pyr2 = [jax.random.uniform(kk[i], (B2, C2, H2 >> (3 - i), W2 >> (3 - i)),
                               dtype=jnp.float32) for i in range(4)]
    loss2 = jax.block_until_ready(transmission_loss(pyr2, gt2, weights, row_block=6))
    ref2 = _reference_numpy(pyr2, gt2, weights)
    assert np.allclose(float(loss2), ref2, atol=1e-4), (float(loss2), ref2)

    # --- case 3: bf16 feed of gt + preds + operators, f32 accumulation --------
    loss_bf16 = jax.block_until_ready(
        transmission_loss(pyr2, gt2, weights, compute_dtype=jnp.bfloat16, row_block=8))
    assert np.allclose(float(loss_bf16), ref2, rtol=3e-2, atol=3e-2), (float(loss_bf16), ref2)

    # --- case 4: non-pyramid torch branch: plain mean-L1 (lane-dense 2D path) -
    loss_single = jax.block_until_ready(transmission_loss(pyramid[3], gt_trans))
    ref_single = _reference_numpy(pyramid[3], gt_trans, weights)
    assert np.allclose(float(loss_single), ref_single, atol=1e-5), (float(loss_single), ref_single)

    print("KERNEL_OK")
</pallas_src>

<mosaic_0001>
module attributes {stable_mosaic.version = 11 : i64} {
  func.func @kernel(%arg0: i32, %arg1: memref<2x16x16xf32, #tpu.memory_space<vmem>>, %arg2: memref<2x2x2xf32, #tpu.memory_space<vmem>>, %arg3: memref<2x4x4xf32, #tpu.memory_space<vmem>>, %arg4: memref<2x8x8xf32, #tpu.memory_space<vmem>>, %arg5: memref<2x16x16xf32, #tpu.memory_space<vmem>>, %arg6: memref<16x14xf32, #tpu.memory_space<vmem>>, %arg7: memref<16x2xf32, #tpu.memory_space<vmem>>, %arg8: memref<16x4xf32, #tpu.memory_space<vmem>>, %arg9: memref<16x8xf32, #tpu.memory_space<vmem>>, %arg10: memref<1x1xf32, #tpu.memory_space<smem>>) attributes {dimension_semantics = [#tpu.dimension_semantics<parallel>], iteration_bounds = array<i64: 1>, scalar_prefetch = 0 : i64, scratch_operands = 0 : i64, tpu.core_type = #tpu.core_type<tc>, window_params = [{transform_indices = @transform_0, window_bounds = array<i64: 2, 16, 16>}, {transform_indices = @transform_1, window_bounds = array<i64: 2, 2, 2>}, {transform_indices = @transform_2, window_bounds = array<i64: 2, 4, 4>}, {transform_indices = @transform_3, window_bounds = array<i64: 2, 8, 8>}, {transform_indices = @transform_4, window_bounds = array<i64: 2, 16, 16>}, {pipeline_mode = #tpu.pipeline_mode<synchronous>, transform_indices = @transform_5, window_bounds = array<i64: 16, 14>}, {pipeline_mode = #tpu.pipeline_mode<synchronous>, transform_indices = @transform_6, window_bounds = array<i64: 16, 2>}, {pipeline_mode = #tpu.pipeline_mode<synchronous>, transform_indices = @transform_7, window_bounds = array<i64: 16, 4>}, {pipeline_mode = #tpu.pipeline_mode<synchronous>, transform_indices = @transform_8, window_bounds = array<i64: 16, 8>}, {transform_indices = @transform_9, window_bounds = array<i64: 1, 1>}]} {
    %c0 = arith.constant 0 : index
    %c0_0 = arith.constant 0 : index
    %c0_1 = arith.constant 0 : index
    %0 = vector.load %arg1[%c0, %c0_0, %c0_1] : memref<2x16x16xf32, #tpu.memory_space<vmem>>, vector<2x16x16xf32>
    %1 = vector.shape_cast %0 : vector<2x16x16xf32> to vector<32x16xf32>
    %c0_2 = arith.constant 0 : index
    %c0_3 = arith.constant 0 : index
    %2 = vector.load %arg6[%c0_2, %c0_3] : memref<16x14xf32, #tpu.memory_space<vmem>>, vector<16x14xf32>
    %cst = arith.constant dense<0.000000e+00> : vector<32x14xf32>
    %3 = tpu.matmul %1, %2, %cst {dimension_numbers = #tpu.dot_dimension_numbers<[1], [0], [0], [1], [0, 0, 1, 1], [], []>} : vector<32x16xf32>, vector<16x14xf32>, vector<32x14xf32> -> vector<32x14xf32>
    %c0_4 = arith.constant 0 : index
    %c0_5 = arith.constant 0 : index
    %c0_6 = arith.constant 0 : index
    %4 = vector.load %arg2[%c0_4, %c0_5, %c0_6] : memref<2x2x2xf32, #tpu.memory_space<vmem>>, vector<2x2x2xf32>
    %5 = vector.extract_strided_slice %3 {offsets = [0, 0], sizes = [32, 2], strides = [1, 1]} : vector<32x14xf32> to vector<32x2xf32>
    %6 = vector.shape_cast %5 : vector<32x2xf32> to vector<2x16x2xf32>
    %c0_7 = arith.constant 0 : index
    %c0_8 = arith.constant 0 : index
    %7 = vector.load %arg7[%c0_7, %c0_8] : memref<16x2xf32, #tpu.memory_space<vmem>>, vector<16x2xf32>
    "tpu.trace_start"() <{level = 10 : i32, message = "bhk,ho->bko"}> : () -> ()
    %cst_9 = arith.constant dense<0.000000e+00> : vector<2x2x2xf32>
    %8 = tpu.matmul %6, %7, %cst_9 {dimension_numbers = #tpu.dot_dimension_numbers<[1], [0], [0, 2], [1], [0, 0, 0, 2, 1, 1], [], []>} : vector<2x16x2xf32>, vector<16x2xf32>, vector<2x2x2xf32> -> vector<2x2x2xf32>
    "tpu.trace_stop"() : () -> ()
    %9 = tpu.transpose %8, [0, 2, 1] : vector<2x2x2xf32> -> vector<2x2x2xf32>
    %cst_10 = arith.constant 0.000000e+00 : f32
    %cst_11 = arith.constant 1.000000e+00 : f32
    %10 = vector.broadcast %cst_10 : f32 to vector<2x2x2xf32>
    %11 = arith.maximumf %10, %9 : vector<2x2x2xf32>
    %12 = vector.broadcast %cst_11 : f32 to vector<2x2x2xf32>
    %13 = arith.minimumf %12, %11 : vector<2x2x2xf32>
    %14 = arith.subf %4, %13 : vector<2x2x2xf32>
    %15 = math.absf %14 : vector<2x2x2xf32>
    %16 = vector.shape_cast %15 : vector<2x2x2xf32> to vector<1x2x2x2xf32>
    %cst_12 = arith.constant dense<0.000000e+00> : vector<1xf32>
    %17 = vector.multi_reduction <add>, %16, %cst_12 [1, 2, 3] : vector<1x2x2x2xf32> to vector<1xf32>
    %18 = vector.shape_cast %17 : vector<1xf32> to vector<1x1x1x1xf32>
    %19 = vector.extract %18[0, 0, 0, 0] : f32 from vector<1x1x1x1xf32>
    %cst_13 = arith.constant 7.500000e-02 : f32
    %20 = arith.mulf %cst_13, %19 : f32
    %cst_14 = arith.constant 0.000000e+00 : f32
    %21 = arith.addf %cst_14, %20 : f32
    %c0_15 = arith.constant 0 : index
    %c0_16 = arith.constant 0 : index
    %c0_17 = arith.constant 0 : index
    %22 = vector.load %arg3[%c0_15, %c0_16, %c0_17] : memref<2x4x4xf32, #tpu.memory_space<vmem>>, vector<2x4x4xf32>
    %23 = vector.extract_strided_slice %3 {offsets = [0, 2], sizes = [32, 4], strides = [1, 1]} : vector<32x14xf32> to vector<32x4xf32>
    %24 = vector.shape_cast %23 : vector<32x4xf32> to vector<2x16x4xf32>
    %c0_18 = arith.constant 0 : index
    %c0_19 = arith.constant 0 : index
    %25 = vector.load %arg8[%c0_18, %c0_19] : memref<16x4xf32, #tpu.memory_space<vmem>>, vector<16x4xf32>
    "tpu.trace_start"() <{level = 10 : i32, message = "bhk,ho->bko"}> : () -> ()
    %cst_20 = arith.constant dense<0.000000e+00> : vector<2x4x4xf32>
    %26 = tpu.matmul %24, %25, %cst_20 {dimension_numbers = #tpu.dot_dimension_numbers<[1], [0], [0, 2], [1], [0, 0, 0, 2, 1, 1], [], []>} : vector<2x16x4xf32>, vector<16x4xf32>, vector<2x4x4xf32> -> vector<2x4x4xf32>
    "tpu.trace_stop"() : () -> ()
    %27 = tpu.transpose %26, [0, 2, 1] : vector<2x4x4xf32> -> vector<2x4x4xf32>
    %cst_21 = arith.constant 0.000000e+00 : f32
    %cst_22 = arith.constant 1.000000e+00 : f32
    %28 = vector.broadcast %cst_21 : f32 to vector<2x4x4xf32>
    %29 = arith.maximumf %28, %27 : vector<2x4x4xf32>
    %30 = vector.broadcast %cst_22 : f32 to vector<2x4x4xf32>
    %31 = arith.minimumf %30, %29 : vector<2x4x4xf32>
    %32 = arith.subf %22, %31 : vector<2x4x4xf32>
    %33 = math.absf %32 : vector<2x4x4xf32>
    %34 = vector.shape_cast %33 : vector<2x4x4xf32> to vector<1x2x4x4xf32>
    %cst_23 = arith.constant dense<0.000000e+00> : vector<1xf32>
    %35 = vector.multi_reduction <add>, %34, %cst_23 [1, 2, 3] : vector<1x2x4x4xf32> to vector<1xf32>
    %36 = vector.shape_cast %35 : vector<1xf32> to vector<1x1x1x1xf32>
    %37 = vector.extract %36[0, 0, 0, 0] : f32 from vector<1x1x1x1xf32>
    %cst_24 = arith.constant 2.500000e-02 : f32
    %38 = arith.mulf %cst_24, %37 : f32
    %39 = arith.addf %21, %38 : f32
    %c0_25 = arith.constant 0 : index
    %c0_26 = arith.constant 0 : index
    %c0_27 = arith.constant 0 : index
    %40 = vector.load %arg4[%c0_25, %c0_26, %c0_27] : memref<2x8x8xf32, #tpu.memory_space<vmem>>, vector<2x8x8xf32>
    %41 = vector.extract_strided_slice %3 {offsets = [0, 6], sizes = [32, 8], strides = [1, 1]} : vector<32x14xf32> to vector<32x8xf32>
    %42 = vector.shape_cast %41 : vector<32x8xf32> to vector<2x16x8xf32>
    %c0_28 = arith.constant 0 : index
    %c0_29 = arith.constant 0 : index
    %43 = vector.load %arg9[%c0_28, %c0_29] : memref<16x8xf32, #tpu.memory_space<vmem>>, vector<16x8xf32>
    "tpu.trace_start"() <{level = 10 : i32, message = "bhk,ho->bko"}> : () -> ()
    %cst_30 = arith.constant dense<0.000000e+00> : vector<2x8x8xf32>
    %44 = tpu.matmul %42, %43, %cst_30 {dimension_numbers = #tpu.dot_dimension_numbers<[1], [0], [0, 2], [1], [0, 0, 0, 2, 1, 1], [], []>} : vector<2x16x8xf32>, vector<16x8xf32>, vector<2x8x8xf32> -> vector<2x8x8xf32>
    "tpu.trace_stop"() : () -> ()
    %45 = tpu.transpose %44, [0, 2, 1] : vector<2x8x8xf32> -> vector<2x8x8xf32>
    %cst_31 = arith.constant 0.000000e+00 : f32
    %cst_32 = arith.constant 1.000000e+00 : f32
    %46 = vector.broadcast %cst_31 : f32 to vector<2x8x8xf32>
    %47 = arith.maximumf %46, %45 : vector<2x8x8xf32>
    %48 = vector.broadcast %cst_32 : f32 to vector<2x8x8xf32>
    %49 = arith.minimumf %48, %47 : vector<2x8x8xf32>
    %50 = arith.subf %40, %49 : vector<2x8x8xf32>
    %51 = math.absf %50 : vector<2x8x8xf32>
    %52 = vector.shape_cast %51 : vector<2x8x8xf32> to vector<1x2x8x8xf32>
    %cst_33 = arith.constant dense<0.000000e+00> : vector<1xf32>
    %53 = vector.multi_reduction <add>, %52, %cst_33 [1, 2, 3] : vector<1x2x8x8xf32> to vector<1xf32>
    %54 = vector.shape_cast %53 : vector<1xf32> to vector<1x1x1x1xf32>
    %55 = vector.extract %54[0, 0, 0, 0] : f32 from vector<1x1x1x1xf32>
    %cst_34 = arith.constant 7.812500e-03 : f32
    %56 = arith.mulf %cst_34, %55 : f32
    %57 = arith.addf %39, %56 : f32
    %c0_35 = arith.constant 0 : index
    %c0_36 = arith.constant 0 : index
    %c0_37 = arith.constant 0 : index
    %58 = vector.load %arg5[%c0_35, %c0_36, %c0_37] : memref<2x16x16xf32, #tpu.memory_space<vmem>>, vector<2x16x16xf32>
    %cst_38 = arith.constant 0.000000e+00 : f32
    %cst_39 = arith.constant 1.000000e+00 : f32
    %59 = vector.broadcast %cst_38 : f32 to vector<2x16x16xf32>
    %60 = arith.maximumf %59, %0 : vector<2x16x16xf32>
    %61 = vector.broadcast %cst_39 : f32 to vector<2x16x16xf32>
    %62 = arith.minimumf %61, %60 : vector<2x16x16xf32>
    %63 = arith.subf %58, %62 : vector<2x16x16xf32>
    %64 = math.absf %63 : vector<2x16x16xf32>
    %65 = vector.shape_cast %64 : vector<2x16x16xf32> to vector<1x2x16x16xf32>
    %cst_40 = arith.constant dense<0.000000e+00> : vector<1xf32>
    %66 = vector.multi_reduction <add>, %65, %cst_40 [1, 2, 3] : vector<1x2x16x16xf32> to vector<1xf32>
    %67 = vector.shape_cast %66 : vector<1xf32> to vector<1x1x1x1xf32>
    %68 = vector.extract %67[0, 0, 0, 0] : f32 from vector<1x1x1x1xf32>
    %cst_41 = arith.constant 0.001953125 : f32
    %69 = arith.mulf %cst_41, %68 : f32
    %70 = arith.addf %57, %69 : f32
    %c0_42 = arith.constant 0 : index
    %c0_43 = arith.constant 0 : index
    %71 = memref.load %arg10[%c0_42, %c0_43] : memref<1x1xf32, #tpu.memory_space<smem>>
    memref.store %70, %arg10[%c0_42, %c0_43] : memref<1x1xf32, #tpu.memory_space<smem>>
    return
  }
  func.func @transform_0(%arg0: i32) -> (i32, i32, i32) {
    %c0_i32 = arith.constant 0 : i32
    %c0_i32_0 = arith.constant 0 : i32
    %c0_i32_1 = arith.constant 0 : i32
    return %arg0, %c0_i32, %c0_i32_0 : i32, i32, i32
  }
  func.func @transform_1(%arg0: i32) -> (i32, i32, i32) {
    %c0_i32 = arith.constant 0 : i32
    %c0_i32_0 = arith.constant 0 : i32
    %c0_i32_1 = arith.constant 0 : i32
    return %arg0, %c0_i32, %c0_i32_0 : i32, i32, i32
  }
  func.func @transform_2(%arg0: i32) -> (i32, i32, i32) {
    %c0_i32 = arith.constant 0 : i32
    %c0_i32_0 = arith.constant 0 : i32
    %c0_i32_1 = arith.constant 0 : i32
    return %arg0, %c0_i32, %c0_i32_0 : i32, i32, i32
  }
  func.func @transform_3(%arg0: i32) -> (i32, i32, i32) {
    %c0_i32 = arith.constant 0 : i32
    %c0_i32_0 = arith.constant 0 : i32
    %c0_i32_1 = arith.constant 0 : i32
    return %arg0, %c0_i32, %c0_i32_0 : i32, i32, i32
  }
  func.func @transform_4(%arg0: i32) -> (i32, i32, i32) {
    %c0_i32 = arith.constant 0 : i32
    %c0_i32_0 = arith.constant 0 : i32
    %c0_i32_1 = arith.constant 0 : i32
    return %arg0, %c0_i32, %c0_i32_0 : i32, i32, i32
  }
  func.func @transform_5(%arg0: i32) -> (i32, i32) {
    %c0_i32 = arith.constant 0 : i32
    %c0_i32_0 = arith.constant 0 : i32
    %c0_i32_1 = arith.constant 0 : i32
    return %c0_i32, %c0_i32_0 : i32, i32
  }
  func.func @transform_6(%arg0: i32) -> (i32, i32) {
    %c0_i32 = arith.constant 0 : i32
    %c0_i32_0 = arith.constant 0 : i32
    %c0_i32_1 = arith.constant 0 : i32
    return %c0_i32, %c0_i32_0 : i32, i32
  }
  func.func @transform_7(%arg0: i32) -> (i32, i32) {
    %c0_i32 = arith.constant 0 : i32
    %c0_i32_0 = arith.constant 0 : i32
    %c0_i32_1 = arith.constant 0 : i32
    return %c0_i32, %c0_i32_0 : i32, i32
  }
  func.func @transform_8(%arg0: i32) -> (i32, i32) {
    %c0_i32 = arith.constant 0 : i32
    %c0_i32_0 = arith.constant 0 : i32
    %c0_i32_1 = arith.constant 0 : i32
    return %c0_i32, %c0_i32_0 : i32, i32
  }
  func.func @transform_9(%arg0: i32) -> (i32, i32) {
    %c0_i32 = arith.constant 0 : i32
    %c0_i32_0 = arith.constant 0 : i32
    return %arg0, %c0_i32 : i32, i32
  }
}

</mosaic_0001>

<llo_original>
// kernel: tpu_custom_call.1
$region0: #{tpu_custom_call.1}
  #allocation0 [shape = 'u32[]', space=smem, size = 0x4, offset = 0x4, fixed_abs, tag = 'smem constant byte address 0x4 - core index']
  #allocation1 [shape = 'u32[144,128]{1,0:T(1,128)}', space=vmem, size = 0x12000, scoped, tag = 'internal scratch']
  %s0 = inlined_call_operand.vmem [shape: f32[2,16,16], index: 0, kind: input, shape index: {}]
  %s1 = inlined_call_operand.hbm [shape: f32[2,2,2], index: 1, kind: input, shape index: {}]
  %s2 = inlined_call_operand.hbm [shape: f32[2,4,4], index: 2, kind: input, shape index: {}]
  %s3 = inlined_call_operand.hbm [shape: f32[2,8,8], index: 3, kind: input, shape index: {}]
  %s4 = inlined_call_operand.vmem [shape: f32[2,16,16], index: 4, kind: input, shape index: {}]
  %s5 = inlined_call_operand.hbm [shape: f32[16,14], index: 5, kind: input, shape index: {}]
  %s6 = inlined_call_operand.vmem [shape: f32[16,2], index: 6, kind: input, shape index: {}]
  %s7 = inlined_call_operand.vmem [shape: f32[16,4], index: 7, kind: input, shape index: {}]
  %s8 = inlined_call_operand.vmem [shape: f32[16,8], index: 8, kind: input, shape index: {}]
  %s9 = inlined_call_operand.hbm [shape: f32[1,1], index: 9, kind: output, shape index: {}]
  %s10 = sld [smem:[#allocation0]]
  $region62: #{tpu_custom_call.1} parent=0
    _
  %s12 = ssub.s32 1, %s10
  %s13 = scalar_select 0, %s12, %s10
  $region1: #{tpu_custom_call.1} parent=0
    #allocation2 [shape = 'u8[2048]{0}', space=vmem, size = 0x800, scoped, tag = 'input window, operand 1, single buffered']
    #allocation3 [shape = 's32[1]{0}', space=sflag, size = 0x4, scoped, tag = 'scoped memory for tpu_custom_call.1']
    #allocation4 [shape = 's32[1]{0}', space=sflag, size = 0x4, scoped, tag = 'scoped memory for tpu_custom_call.1']
    #allocation5 [shape = 'u8[4096]{0}', space=vmem, size = 0x1000, scoped, tag = 'input window, operand 2, single buffered']
    #allocation6 [shape = 's32[1]{0}', space=sflag, size = 0x4, scoped, tag = 'scoped memory for tpu_custom_call.1']
    #allocation7 [shape = 'u8[8192]{0}', space=vmem, size = 0x2000, scoped, tag = 'input window, operand 3, single buffered']
    #allocation8 [shape = 'u8[8192]{0}', space=vmem, size = 0x2000, scoped, tag = 'input window, operand 5, single buffered']
    #allocation9 [shape = 's32[1]{0}', space=sflag, size = 0x4, scoped, tag = 'scoped memory for tpu_custom_call.1']
    #allocation10 [shape = 'u8[512]{0}', space=smem, size = 0x200, scoped, tag = 'output window, operand 0, single buffered']
    %14 = vsyncpa [#allocation3], 0
    %15 = vsyncpa [#allocation6], 0
    %16 = vsyncpa [#allocation9], 0
    %17 = vsyncpa [#allocation4], 0
    // Predicated region
    $region2: #{tpu_custom_call.1} parent=1 // pred_check
      _
    $region3: #{tpu_custom_call.1} parent=1 // pred_check_branch
      %19 = sbr.rel (0) target = $region5
    $region4: #{tpu_custom_call.1} parent=1 // pred_region
      _
    $region5: #{tpu_custom_call.1} parent=1 // pred_fallthru
      _
    // Predicated region
    $region6: #{tpu_custom_call.1} parent=1 // pred_check
      _
    $region7: #{tpu_custom_call.1} parent=1 // pred_check_branch
      %21 = sbr.rel (0) target = $region9
    $region8: #{tpu_custom_call.1} parent=1 // pred_region
      %s23 = ssub.s32 64, 64
      %24 = vsyncadd [#allocation3], %s23
      %s25 = sshll.u32 [#allocation2], 4
      %s26 = int_to_ptr.vmem [resolvable:$true] %s25
      %31 = dma.hbm_to_vmem [thread:$0]  %s1, 64, %s26, [#allocation3], 32, 32, 2
    $region9: #{tpu_custom_call.1} parent=1 // pred_fallthru
      _
    // Predicated region
    $region10: #{tpu_custom_call.1} parent=1 // pred_check
      _
    $region11: #{tpu_custom_call.1} parent=1 // pred_check_branch
      %33 = sbr.rel (0) target = $region13
    $region12: #{tpu_custom_call.1} parent=1 // pred_region
      %s35 = ssub.s32 128, 128
      %36 = vsyncadd [#allocation6], %s35
      %s37 = sshll.u32 [#allocation5], 4
      %s38 = int_to_ptr.vmem [resolvable:$true] %s37
      %43 = dma.hbm_to_vmem [thread:$0]  %s2, 128, %s38, [#allocation6], 64, 64, 4
    $region13: #{tpu_custom_call.1} parent=1 // pred_fallthru
      _
    // Predicated region
    $region14: #{tpu_custom_call.1} parent=1 // pred_check
      _
    $region15: #{tpu_custom_call.1} parent=1 // pred_check_branch
      %45 = sbr.rel (0) target = $region17
    $region16: #{tpu_custom_call.1} parent=1 // pred_region
      %s47 = ssub.s32 256, 256
      %48 = vsyncadd [#allocation6], %s47
      %s49 = sshll.u32 [#allocation7], 4
      %s50 = int_to_ptr.vmem [resolvable:$true] %s49
      %55 = dma.hbm_to_vmem [thread:$0]  %s3, 256, %s50, [#allocation6], 128, 128, 8
    $region17: #{tpu_custom_call.1} parent=1 // pred_fallthru
      _
    // Predicated region
    $region18: #{tpu_custom_call.1} parent=1 // pred_check
      _
    $region19: #{tpu_custom_call.1} parent=1 // pred_check_branch
      %57 = sbr.rel (0) target = $region21
    $region20: #{tpu_custom_call.1} parent=1 // pred_region
      _
    $region21: #{tpu_custom_call.1} parent=1 // pred_fallthru
      _
    // Predicated region
    $region22: #{tpu_custom_call.1} parent=1 // pred_check
      _
    $region23: #{tpu_custom_call.1} parent=1 // pred_check_branch
      %59 = sbr.rel (0) target = $region25
    $region24: #{tpu_custom_call.1} parent=1 // pred_region
      %s61 = ssub.s32 256, 256
      %62 = vsyncadd [#allocation9], %s61
      %s63 = sshll.u32 [#allocation8], 4
      %s64 = int_to_ptr.vmem [resolvable:$true] %s63
      %69 = dma.hbm_to_vmem [thread:$0]  %s5, 256, %s64, [#allocation9], 128, 128, 8
    $region25: #{tpu_custom_call.1} parent=1 // pred_fallthru
      _
    // Predicated region
    $region26: #{tpu_custom_call.1} parent=1 // pred_check
      _
    $region27: #{tpu_custom_call.1} parent=1 // pred_check_branch
      %71 = sbr.rel (0) target = $region29
    $region28: #{tpu_custom_call.1} parent=1 // pred_region
      _
    $region29: #{tpu_custom_call.1} parent=1 // pred_fallthru
      _
    // Predicated region
    $region30: #{tpu_custom_call.1} parent=1 // pred_check
      _
    $region31: #{tpu_custom_call.1} parent=1 // pred_check_branch
      %73 = sbr.rel (0) target = $region33
    $region32: #{tpu_custom_call.1} parent=1 // pred_region
      _
    $region33: #{tpu_custom_call.1} parent=1 // pred_fallthru
      _
    // Predicated region
    $region34: #{tpu_custom_call.1} parent=1 // pred_check
      _
    $region35: #{tpu_custom_call.1} parent=1 // pred_check_branch
      %75 = sbr.rel (0) target = $region37
    $region36: #{tpu_custom_call.1} parent=1 // pred_region
      _
    $region37: #{tpu_custom_call.1} parent=1 // pred_fallthru
      _
    // Predicated region
    $region38: #{tpu_custom_call.1} parent=1 // pred_check
      _
    $region39: #{tpu_custom_call.1} parent=1 // pred_check_branch
      %77 = sbr.rel (0) target = $region41
    $region40: #{tpu_custom_call.1} parent=1 // pred_region
      %78 = dma.done [#allocation3], 64
    $region41: #{tpu_custom_call.1} parent=1 // pred_fallthru
      _
    // Predicated region
    $region42: #{tpu_custom_call.1} parent=1 // pred_check
      _
    $region43: #{tpu_custom_call.1} parent=1 // pred_check_branch
      %80 = sbr.rel (0) target = $region45
    $region44: #{tpu_custom_call.1} parent=1 // pred_region
      %81 = dma.done [#allocation6], 128
    $region45: #{tpu_custom_call.1} parent=1 // pred_fallthru
      _
    // Predicated region
    $region46: #{tpu_custom_call.1} parent=1 // pred_check
      _
    $region47: #{tpu_custom_call.1} parent=1 // pred_check_branch
      %83 = sbr.rel (0) target = $region49
    $region48: #{tpu_custom_call.1} parent=1 // pred_region
      %84 = dma.done [#allocation6], 256
    $region49: #{tpu_custom_call.1} parent=1 // pred_fallthru
      _
    // Predicated region
    $region50: #{tpu_custom_call.1} parent=1 // pred_check
      _
    $region51: #{tpu_custom_call.1} parent=1 // pred_check_branch
      %86 = sbr.rel (0) target = $region53
    $region52: #{tpu_custom_call.1} parent=1 // pred_region
      %87 = dma.done [#allocation9], 256
    $region53: #{tpu_custom_call.1} parent=1 // pred_fallthru
      _
    %v88 = vld [vmem:[%s0] sm:$0xff]
    %v89 = vld [vmem:[%s0 + $0x8] sm:$0xff]
    %v90 = vld [vmem:[%s0 + $0x10] sm:$0xff]
    %v91 = vld [vmem:[%s0 + $0x18] sm:$0xff]
    %v92 = vld [vmem:[#allocation8] sm:$0xff]
    %v93 = vld [vmem:[#allocation8 + $0x8] sm:$0xff]
    %vm94 = vcmask 130048
    %v96 = vsel %vm94, %v88, 0
    %v99 = vsel %vm94, %v89, 0
    %v102 = vsel %vm94, %v90, 0
    %v105 = vsel %vm94, %v91, 0
    %107 = vmatprep.subr.mxu0 0.0
    %108 = vmatpush1.msra.mxu0 0.0
    %109 = vmatprep.subr.mxu0 0.0
    %110 = vmatpush1.msra.mxu0 0.0
    %111 = vmatprep.subr.mxu0 0.0
    %112 = vmatpush1.msra.mxu0 0.0
    %113 = vmatprep.subr.mxu0 0.0
    %114 = vmatpush1.msra.mxu0 0.0
    %115 = vmatprep.subr.mxu0 0.0
    %116 = vmatpush1.msra.mxu0 0.0
    %117 = vmatprep.subr.mxu0 0.0
    %118 = vmatpush1.msra.mxu0 0.0
    %119 = vmatprep.subr.mxu0 0.0
    %120 = vmatpush1.msra.mxu0 0.0
    %121 = vmatprep.subr.mxu0 0.0
    %122 = vmatpush1.msra.mxu0 0.0
    %123 = vmatprep.subr.mxu0 0.0
    %124 = vmatpush1.msra.mxu0 0.0
    %125 = vmatprep.subr.mxu0 0.0
    %126 = vmatpush1.msra.mxu0 0.0
    %127 = vmatprep.subr.mxu0 0.0
    %128 = vmatpush1.msra.mxu0 0.0
    %129 = vmatprep.subr.mxu0 0.0
    %130 = vmatpush1.msra.mxu0 0.0
    %131 = vmatprep.subr.mxu0 0.0
    %132 = vmatpush1.msra.mxu0 0.0
    %133 = vmatprep.subr.mxu0 0.0
    %134 = vmatpush1.msra.mxu0 0.0
    %135 = vmatprep.subr.mxu0 0.0
    %136 = vmatpush1.msra.mxu0 %v93
    %137 = vmatprep.subr.mxu0 0.0
    %138 = vmatpush1.msra.mxu0 %v92
    %139 = vmatprep.subr.mxu0 0.0
    %140 = vmatpush2.msra.mxu0 0.0
    %141 = vmatprep.subr.mxu0 0.0
    %142 = vmatpush2.msra.mxu0 0.0
    %143 = vmatprep.subr.mxu0 0.0
    %144 = vmatpush2.msra.mxu0 0.0
    %145 = vmatprep.subr.mxu0 0.0
    %146 = vmatpush2.msra.mxu0 0.0
    %147 = vmatprep.subr.mxu0 0.0
    %148 = vmatpush2.msra.mxu0 0.0
    %149 = vmatprep.subr.mxu0 0.0
    %150 = vmatpush2.msra.mxu0 0.0
    %151 = vmatprep.subr.mxu0 0.0
    %152 = vmatpush2.msra.mxu0 0.0
    %153 = vmatprep.subr.mxu0 0.0
    %154 = vmatpush2.msra.mxu0 0.0
    %155 = vmatprep.subr.mxu0 0.0
    %156 = vmatpush2.msra.mxu0 0.0
    %157 = vmatprep.subr.mxu0 0.0
    %158 = vmatpush2.msra.mxu0 0.0
    %159 = vmatprep.subr.mxu0 0.0
    %160 = vmatpush2.msra.mxu0 0.0
    %161 = vmatprep.subr.mxu0 0.0
    %162 = vmatpush2.msra.mxu0 0.0
    %163 = vmatprep.subr.mxu0 0.0
    %164 = vmatpush2.msra.mxu0 0.0
    %165 = vmatprep.subr.mxu0 0.0
    %166 = vmatpush2.msra.mxu0 0.0
    %167 = vmatprep.subr.mxu0 0.0
    %168 = vmatpush2.msra.mxu0 0.0
    %169 = vmatprep.subr.mxu0 0.0
    %170 = vmatpush2.msra.mxu0 0.0
    %171 = vmatprep.mubr.f32.mxu0 0.0
    %172 = vmatmul.mubr.f32.gmra.mxu0 %v96
    %v173 = vpop.f32.mrf.mxu0
    %v174 = vadd.f32 0.0, %v173
    %v175 = vpop.f32.mrf.mxu0
    %176 = vmatprep.mubr.f32.mxu0 0.0
    %177 = vmatmul.mubr.f32.gmra.mxu0 %v99
    %v178 = vpop.f32.mrf.mxu0
    %v179 = vadd.f32 0.0, %v178
    %v180 = vpop.f32.mrf.mxu0
    %181 = vmatprep.mubr.f32.mxu0 0.0
    %182 = vmatmul.mubr.f32.gmra.mxu0 %v102
    %v183 = vpop.f32.mrf.mxu0
    %v184 = vadd.f32 0.0, %v183
    %v185 = vpop.f32.mrf.mxu0
    %186 = vmatprep.mubr.f32.mxu0 0.0
    %187 = vmatmul.mubr.f32.gmra.mxu0 %v105
    %v188 = vpop.f32.mrf.mxu0
    %v189 = vadd.f32 0.0, %v188
    %v190 = vpop.f32.mrf.mxu0
    %191 = vdwg.mxu0
    %v192 = vld [vmem:[#allocation2] sm:$0x3]
    %v193 = vld [vmem:[#allocation2 + $0x2] sm:$0x3]
    %v194 = vld [vmem:[%s6] sm:$0xff]
    %v195 = vld [vmem:[%s6 + $0x8] sm:$0xff]
    %196 = vxpose.xlu0.b32.start [1/16] %v174, 128
    %197 = vxpose.xlu0.b32.cont [2/16] %v179, 128
    %198 = vxpose.xlu0.b32.cont [3/16] 0.0, 128
    %199 = vxpose.xlu0.b32.cont [4/16] 0.0, 128
    %200 = vxpose.xlu0.b32.cont [5/16] 0.0, 128
    %201 = vxpose.xlu0.b32.cont [6/16] 0.0, 128
    %202 = vxpose.xlu0.b32.cont [7/16] 0.0, 128
    %203 = vxpose.xlu0.b32.cont [8/16] 0.0, 128
    %204 = vxpose.xlu0.b32.cont [9/16] 0.0, 128
    %205 = vxpose.xlu0.b32.cont [10/16] 0.0, 128
    %206 = vxpose.xlu0.b32.cont [11/16] 0.0, 128
    %207 = vxpose.xlu0.b32.cont [12/16] 0.0, 128
    %208 = vxpose.xlu0.b32.cont [13/16] 0.0, 128
    %209 = vxpose.xlu0.b32.cont [14/16] 0.0, 128
    %210 = vxpose.xlu0.b32.cont [15/16] 0.0, 128
    %211 = vxpose.xlu0.b32.end [16/16] 0.0, 128
    %v212 = vpop.trf.xlu0
    %v213 = vpop.trf.xlu0
    %v214 = vpop.trf.xlu0
    %v215 = vpop.trf.xlu0
    %v216 = vpop.trf.xlu0
    %v217 = vpop.trf.xlu0
    %v218 = vpop.trf.xlu0
    %v219 = vpop.trf.xlu0
    %v220 = vpop.trf.xlu0
    %v221 = vpop.trf.xlu0
    %v222 = vpop.trf.xlu0
    %v223 = vpop.trf.xlu0
    %v224 = vpop.trf.xlu0
    %v225 = vpop.trf.xlu0
    %v226 = vpop.trf.xlu0
    %v227 = vpop.trf.xlu0
    %228 = vxpose.xlu0.b32.start [1/16] %v184, 128
    %229 = vxpose.xlu0.b32.cont [2/16] %v189, 128
    %230 = vxpose.xlu0.b32.cont [3/16] 0.0, 128
    %231 = vxpose.xlu0.b32.cont [4/16] 0.0, 128
    %232 = vxpose.xlu0.b32.cont [5/16] 0.0, 128
    %233 = vxpose.xlu0.b32.cont [6/16] 0.0, 128
    %234 = vxpose.xlu0.b32.cont [7/16] 0.0, 128
    %235 = vxpose.xlu0.b32.cont [8/16] 0.0, 128
    %236 = vxpose.xlu0.b32.cont [9/16] 0.0, 128
    %237 = vxpose.xlu0.b32.cont [10/16] 0.0, 128
    %238 = vxpose.xlu0.b32.cont [11/16] 0.0, 128
    %239 = vxpose.xlu0.b32.cont [12/16] 0.0, 128
    %240 = vxpose.xlu0.b32.cont [13/16] 0.0, 128
    %241 = vxpose.xlu0.b32.cont [14/16] 0.0, 128
    %242 = vxpose.xlu0.b32.cont [15/16] 0.0, 128
    %243 = vxpose.xlu0.b32.end [16/16] 0.0, 128
    %v244 = vpop.trf.xlu0
    %v245 = vpop.trf.xlu0
    %v246 = vpop.trf.xlu0
    %v247 = vpop.trf.xlu0
    %v248 = vpop.trf.xlu0
    %v249 = vpop.trf.xlu0
    %v250 = vpop.trf.xlu0
    %v251 = vpop.trf.xlu0
    %v252 = vpop.trf.xlu0
    %v253 = vpop.trf.xlu0
    %v254 = vpop.trf.xlu0
    %v255 = vpop.trf.xlu0
    %v256 = vpop.trf.xlu0
    %v257 = vpop.trf.xlu0
    %v258 = vpop.trf.xlu0
    %v259 = vpop.trf.xlu0
    %v262 = vcombine.low %v212, %v244
    %v264 = vunpack.c.l.s4 1983009808
    %v265 = vunpack.c.0.s8 %v264
    %v266 = vlaneseq
    %v267 = vshrl.u32 %v266, 7
    %v268 = vsub.s32 %v265, %v267
    %v269 = vrot.slane %v262, %v268
    %v270 = vsel %vm94, %v269, 0
    %272 = vmatprep.subr.mxu0 0.0
    %273 = vmatpush1.msra.mxu0 0.0
    %274 = vmatprep.subr.mxu0 0.0
    %275 = vmatpush1.msra.mxu0 0.0
    %276 = vmatprep.subr.mxu0 0.0
    %277 = vmatpush1.msra.mxu0 0.0
    %278 = vmatprep.subr.mxu0 0.0
    %279 = vmatpush1.msra.mxu0 0.0
    %280 = vmatprep.subr.mxu0 0.0
    %281 = vmatpush1.msra.mxu0 0.0
    %282 = vmatprep.subr.mxu0 0.0
    %283 = vmatpush1.msra.mxu0 0.0
    %284 = vmatprep.subr.mxu0 0.0
    %285 = vmatpush1.msra.mxu0 0.0
    %286 = vmatprep.subr.mxu0 0.0
    %287 = vmatpush1.msra.mxu0 0.0
    %288 = vmatprep.subr.mxu0 0.0
    %289 = vmatpush1.msra.mxu0 0.0
    %290 = vmatprep.subr.mxu0 0.0
    %291 = vmatpush1.msra.mxu0 0.0
    %292 = vmatprep.subr.mxu0 0.0
    %293 = vmatpush1.msra.mxu0 0.0
    %294 = vmatprep.subr.mxu0 0.0
    %295 = vmatpush1.msra.mxu0 0.0
    %296 = vmatprep.subr.mxu0 0.0
    %297 = vmatpush1.msra.mxu0 0.0
    %298 = vmatprep.subr.mxu0 0.0
    %299 = vmatpush1.msra.mxu0 0.0
    %300 = vmatprep.subr.mxu0 0.0
    %301 = vmatpush1.msra.mxu0 %v195
    %302 = vmatprep.subr.mxu0 0.0
    %303 = vmatpush1.msra.mxu0 %v194
    %304 = vmatprep.subr.mxu0 0.0
    %305 = vmatpush2.msra.mxu0 0.0
    %306 = vmatprep.subr.mxu0 0.0
    %307 = vmatpush2.msra.mxu0 0.0
    %308 = vmatprep.subr.mxu0 0.0
    %309 = vmatpush2.msra.mxu0 0.0
    %310 = vmatprep.subr.mxu0 0.0
    %311 = vmatpush2.msra.mxu0 0.0
    %312 = vmatprep.subr.mxu0 0.0
    %313 = vmatpush2.msra.mxu0 0.0
    %314 = vmatprep.subr.mxu0 0.0
    %315 = vmatpush2.msra.mxu0 0.0
    %316 = vmatprep.subr.mxu0 0.0
    %317 = vmatpush2.msra.mxu0 0.0
    %318 = vmatprep.subr.mxu0 0.0
    %319 = vmatpush2.msra.mxu0 0.0
    %320 = vmatprep.subr.mxu0 0.0
    %321 = vmatpush2.msra.mxu0 0.0
    %322 = vmatprep.subr.mxu0 0.0
    %323 = vmatpush2.msra.mxu0 0.0
    %324 = vmatprep.subr.mxu0 0.0
    %325 = vmatpush2.msra.mxu0 0.0
    %326 = vmatprep.subr.mxu0 0.0
    %327 = vmatpush2.msra.mxu0 0.0
    %328 = vmatprep.subr.mxu0 0.0
    %329 = vmatpush2.msra.mxu0 0.0
    %330 = vmatprep.subr.mxu0 0.0
    %331 = vmatpush2.msra.mxu0 0.0
    %332 = vmatprep.subr.mxu0 0.0
    %333 = vmatpush2.msra.mxu0 0.0
    %334 = vmatprep.subr.mxu0 0.0
    %335 = vmatpush2.msra.mxu0 0.0
    %336 = vmatprep.mubr.f32.mxu0 0.0
    %337 = vmatmul.mubr.f32.gmra.mxu0 %v270
    %v338 = vpop.f32.mrf.mxu0
    %v339 = vadd.f32 0.0, %v338
    %v340 = vpop.f32.mrf.mxu0
    %341 = vdwg.mxu0
    %v344 = vunpack.c.l.s4 1983009808
    %v345 = vunpack.c.0.s8 %v344
    %v346 = vlaneseq
    %v347 = vshrl.u32 %v346, 7
    %v348 = vsub.s32 %v345, %v347
    %v349 = vrot.slane %v339, %v348
    %v350 = vcombine.high %v349, %v349
    %353 = vxpose.xlu0.b32.start [1/16] %v349, 128
    %354 = vxpose.xlu0.b32.cont [2/16] 0.0, 128
    %355 = vxpose.xlu0.b32.cont [3/16] 0.0, 128
    %356 = vxpose.xlu0.b32.cont [4/16] 0.0, 128
    %357 = vxpose.xlu0.b32.cont [5/16] 0.0, 128
    %358 = vxpose.xlu0.b32.cont [6/16] 0.0, 128
    %359 = vxpose.xlu0.b32.cont [7/16] 0.0, 128
    %360 = vxpose.xlu0.b32.cont [8/16] 0.0, 128
    %361 = vxpose.xlu0.b32.cont [9/16] 0.0, 128
    %362 = vxpose.xlu0.b32.cont [10/16] 0.0, 128
    %363 = vxpose.xlu0.b32.cont [11/16] 0.0, 128
    %364 = vxpose.xlu0.b32.cont [12/16] 0.0, 128
    %365 = vxpose.xlu0.b32.cont [13/16] 0.0, 128
    %366 = vxpose.xlu0.b32.cont [14/16] 0.0, 128
    %367 = vxpose.xlu0.b32.cont [15/16] 0.0, 128
    %368 = vxpose.xlu0.b32.end [16/16] 0.0, 128
    %v369 = vpop.trf.xlu0
    %v370 = vpop.trf.xlu0
    %v371 = vpop.trf.xlu0
    %v372 = vpop.trf.xlu0
    %v373 = vpop.trf.xlu0
    %v374 = vpop.trf.xlu0
    %v375 = vpop.trf.xlu0
    %v376 = vpop.trf.xlu0
    %v377 = vpop.trf.xlu0
    %v378 = vpop.trf.xlu0
    %v379 = vpop.trf.xlu0
    %v380 = vpop.trf.xlu0
    %v381 = vpop.trf.xlu0
    %v382 = vpop.trf.xlu0
    %v383 = vpop.trf.xlu0
    %v384 = vpop.trf.xlu0
    %385 = vxpose.xlu0.b32.start [1/16] %v350, 128
    %386 = vxpose.xlu0.b32.cont [2/16] 0.0, 128
    %387 = vxpose.xlu0.b32.cont [3/16] 0.0, 128
    %388 = vxpose.xlu0.b32.cont [4/16] 0.0, 128
    %389 = vxpose.xlu0.b32.cont [5/16] 0.0, 128
    %390 = vxpose.xlu0.b32.cont [6/16] 0.0, 128
    %391 = vxpose.xlu0.b32.cont [7/16] 0.0, 128
    %392 = vxpose.xlu0.b32.cont [8/16] 0.0, 128
    %393 = vxpose.xlu0.b32.cont [9/16] 0.0, 128
    %394 = vxpose.xlu0.b32.cont [10/16] 0.0, 128
    %395 = vxpose.xlu0.b32.cont [11/16] 0.0, 128
    %396 = vxpose.xlu0.b32.cont [12/16] 0.0, 128
    %397 = vxpose.xlu0.b32.cont [13/16] 0.0, 128
    %398 = vxpose.xlu0.b32.cont [14/16] 0.0, 128
    %399 = vxpose.xlu0.b32.cont [15/16] 0.0, 128
    %400 = vxpose.xlu0.b32.end [16/16] 0.0, 128
    %v401 = vpop.trf.xlu0
    %v402 = vpop.trf.xlu0
    %v403 = vpop.trf.xlu0
    %v404 = vpop.trf.xlu0
    %v405 = vpop.trf.xlu0
    %v406 = vpop.trf.xlu0
    %v407 = vpop.trf.xlu0
    %v408 = vpop.trf.xlu0
    %v409 = vpop.trf.xlu0
    %v410 = vpop.trf.xlu0
    %v411 = vpop.trf.xlu0
    %v412 = vpop.trf.xlu0
    %v413 = vpop.trf.xlu0
    %v414 = vpop.trf.xlu0
    %v415 = vpop.trf.xlu0
    %v416 = vpop.trf.xlu0
    %v417 = vmax.f32 %v369, 0.0
    %v418 = vmax.f32 %v401, 0.0
    %v419 = vmin.f32 %v417, 1.0
    %v420 = vmin.f32 %v418, 1.0
    %v421 = vsub.f32 %v192, %v419
    %v422 = vsub.f32 %v193, %v420
    %v423 = vand.u32 2147483647, %v421
    %v424 = vand.u32 2147483647, %v422
    %vm425 = vcmask 9216
    %v426 = vsel %vm425, %v423, 0.0
    %v427 = vsel %vm425, %v424, 0.0
    %v428 = vadd.f32 %v426, %v427
    %429 = vadd.xlane.f32.xlu0 %v428
    %v430 = vpop.xlane.xlu0 %429
    %v431 = vrot.slane %v430, 4
    %v432 = vadd.f32 %v430, %v431
    %v433 = vrot.slane %v432, 2
    %v434 = vadd.f32 %v432, %v433
    %v435 = vrot.slane %v434, 1
    %v436 = vadd.f32 %v434, %v435
    %s437 = vtos %v436
    %s438 = smul.f32 %s437, 0.075
    %s439 = sadd.f32 %s438, 0.0
    %v440 = vld [vmem:[#allocation5] sm:$0xf]
    %v441 = vld [vmem:[#allocation5 + $0x4] sm:$0xf]
    %v442 = vld [vmem:[%s7] sm:$0xff]
    %v443 = vld [vmem:[%s7 + $0x8] sm:$0xff]
    %448 = vrot.lane.b32.xlu0 %v174, 126
    %v449 = vpop.permute.xlu0 %448
    %450 = vrot.lane.b32.xlu0 %v179, 126
    %v451 = vpop.permute.xlu0 %450
    %452 = vrot.lane.b32.xlu0 %v184, 126
    %v453 = vpop.permute.xlu0 %452
    %454 = vrot.lane.b32.xlu0 %v189, 126
    %v455 = vpop.permute.xlu0 %454
    %460 = vxpose.xlu0.b32.start [1/16] %v449, 128
    %461 = vxpose.xlu0.b32.cont [2/16] %v451, 128
    %462 = vxpose.xlu0.b32.cont [3/16] 0.0, 128
    %463 = vxpose.xlu0.b32.cont [4/16] 0.0, 128
    %464 = vxpose.xlu0.b32.cont [5/16] 0.0, 128
    %465 = vxpose.xlu0.b32.cont [6/16] 0.0, 128
    %466 = vxpose.xlu0.b32.cont [7/16] 0.0, 128
    %467 = vxpose.xlu0.b32.cont [8/16] 0.0, 128
    %468 = vxpose.xlu0.b32.cont [9/16] 0.0, 128
    %469 = vxpose.xlu0.b32.cont [10/16] 0.0, 128
    %470 = vxpose.xlu0.b32.cont [11/16] 0.0, 128
    %471 = vxpose.xlu0.b32.cont [12/16] 0.0, 128
    %472 = vxpose.xlu0.b32.cont [13/16] 0.0, 128
    %473 = vxpose.xlu0.b32.cont [14/16] 0.0, 128
    %474 = vxpose.xlu0.b32.cont [15/16] 0.0, 128
    %475 = vxpose.xlu0.b32.end [16/16] 0.0, 128
    %v476 = vpop.trf.xlu0
    %v477 = vpop.trf.xlu0
    %v478 = vpop.trf.xlu0
    %v479 = vpop.trf.xlu0
    %v480 = vpop.trf.xlu0
    %v481 = vpop.trf.xlu0
    %v482 = vpop.trf.xlu0
    %v483 = vpop.trf.xlu0
    %v484 = vpop.trf.xlu0
    %v485 = vpop.trf.xlu0
    %v486 = vpop.trf.xlu0
    %v487 = vpop.trf.xlu0
    %v488 = vpop.trf.xlu0
    %v489 = vpop.trf.xlu0
    %v490 = vpop.trf.xlu0
    %v491 = vpop.trf.xlu0
    %492 = vxpose.xlu0.b32.start [1/16] %v453, 128
    %493 = vxpose.xlu0.b32.cont [2/16] %v455, 128
    %494 = vxpose.xlu0.b32.cont [3/16] 0.0, 128
    %495 = vxpose.xlu0.b32.cont [4/16] 0.0, 128
    %496 = vxpose.xlu0.b32.cont [5/16] 0.0, 128
    %497 = vxpose.xlu0.b32.cont [6/16] 0.0, 128
    %498 = vxpose.xlu0.b32.cont [7/16] 0.0, 128
    %499 = vxpose.xlu0.b32.cont [8/16] 0.0, 128
    %500 = vxpose.xlu0.b32.cont [9/16] 0.0, 128
    %501 = vxpose.xlu0.b32.cont [10/16] 0.0, 128
    %502 = vxpose.xlu0.b32.cont [11/16] 0.0, 128
    %503 = vxpose.xlu0.b32.cont [12/16] 0.0, 128
    %504 = vxpose.xlu0.b32.cont [13/16] 0.0, 128
    %505 = vxpose.xlu0.b32.cont [14/16] 0.0, 128
    %506 = vxpose.xlu0.b32.cont [15/16] 0.0, 128
    %507 = vxpose.xlu0.b32.end [16/16] 0.0, 128
    %v508 = vpop.trf.xlu0
    %v509 = vpop.trf.xlu0
    %v510 = vpop.trf.xlu0
    %v511 = vpop.trf.xlu0
    %v512 = vpop.trf.xlu0
    %v513 = vpop.trf.xlu0
    %v514 = vpop.trf.xlu0
    %v515 = vpop.trf.xlu0
    %v516 = vpop.trf.xlu0
    %v517 = vpop.trf.xlu0
    %v518 = vpop.trf.xlu0
    %v519 = vpop.trf.xlu0
    %v520 = vpop.trf.xlu0
    %v521 = vpop.trf.xlu0
    %v522 = vpop.trf.xlu0
    %v523 = vpop.trf.xlu0
    %v526 = vcombine.low %v476, %v508
    %v527 = vsel %vm94, %v526, 0
    %529 = vmatprep.subr.mxu0 0.0
    %530 = vmatpush1.msra.mxu0 0.0
    %531 = vmatprep.subr.mxu0 0.0
    %532 = vmatpush1.msra.mxu0 0.0
    %533 = vmatprep.subr.mxu0 0.0
    %534 = vmatpush1.msra.mxu0 0.0
    %535 = vmatprep.subr.mxu0 0.0
    %536 = vmatpush1.msra.mxu0 0.0
    %537 = vmatprep.subr.mxu0 0.0
    %538 = vmatpush1.msra.mxu0 0.0
    %539 = vmatprep.subr.mxu0 0.0
    %540 = vmatpush1.msra.mxu0 0.0
    %541 = vmatprep.subr.mxu0 0.0
    %542 = vmatpush1.msra.mxu0 0.0
    %543 = vmatprep.subr.mxu0 0.0
    %544 = vmatpush1.msra.mxu0 0.0
    %545 = vmatprep.subr.mxu0 0.0
    %546 = vmatpush1.msra.mxu0 0.0
    %547 = vmatprep.subr.mxu0 0.0
    %548 = vmatpush1.msra.mxu0 0.0
    %549 = vmatprep.subr.mxu0 0.0
    %550 = vmatpush1.msra.mxu0 0.0
    %551 = vmatprep.subr.mxu0 0.0
    %552 = vmatpush1.msra.mxu0 0.0
    %553 = vmatprep.subr.mxu0 0.0
    %554 = vmatpush1.msra.mxu0 0.0
    %555 = vmatprep.subr.mxu0 0.0
    %556 = vmatpush1.msra.mxu0 0.0
    %557 = vmatprep.subr.mxu0 0.0
    %558 = vmatpush1.msra.mxu0 %v443
    %559 = vmatprep.subr.mxu0 0.0
    %560 = vmatpush1.msra.mxu0 %v442
    %561 = vmatprep.subr.mxu0 0.0
    %562 = vmatpush2.msra.mxu0 0.0
    %563 = vmatprep.subr.mxu0 0.0
    %564 = vmatpush2.msra.mxu0 0.0
    %565 = vmatprep.subr.mxu0 0.0
    %566 = vmatpush2.msra.mxu0 0.0
    %567 = vmatprep.subr.mxu0 0.0
    %568 = vmatpush2.msra.mxu0 0.0
    %569 = vmatprep.subr.mxu0 0.0
    %570 = vmatpush2.msra.mxu0 0.0
    %571 = vmatprep.subr.mxu0 0.0
    %572 = vmatpush2.msra.mxu0 0.0
    %573 = vmatprep.subr.mxu0 0.0
    %574 = vmatpush2.msra.mxu0 0.0
    %575 = vmatprep.subr.mxu0 0.0
    %576 = vmatpush2.msra.mxu0 0.0
    %577 = vmatprep.subr.mxu0 0.0
    %578 = vmatpush2.msra.mxu0 0.0
    %579 = vmatprep.subr.mxu0 0.0
    %580 = vmatpush2.msra.mxu0 0.0
    %581 = vmatprep.subr.mxu0 0.0
    %582 = vmatpush2.msra.mxu0 0.0
    %583 = vmatprep.subr.mxu0 0.0
    %584 = vmatpush2.msra.mxu0 0.0
    %585 = vmatprep.subr.mxu0 0.0
    %586 = vmatpush2.msra.mxu0 0.0
    %587 = vmatprep.subr.mxu0 0.0
    %588 = vmatpush2.msra.mxu0 0.0
    %589 = vmatprep.subr.mxu0 0.0
    %590 = vmatpush2.msra.mxu0 0.0
    %591 = vmatprep.subr.mxu0 0.0
    %592 = vmatpush2.msra.mxu0 0.0
    %593 = vmatprep.mubr.f32.mxu0 0.0
    %594 = vmatmul.mubr.f32.gmra.mxu0 %v527
    %v595 = vpop.f32.mrf.mxu0
    %v596 = vadd.f32 0.0, %v595
    %v597 = vpop.f32.mrf.mxu0
    %598 = vdwg.mxu0
    %v600 = vcombine.high %v596, %v596
    %602 = vxpose.xlu0.b32.start [1/16] %v596, 128
    %603 = vxpose.xlu0.b32.cont [2/16] 0.0, 128
    %604 = vxpose.xlu0.b32.cont [3/16] 0.0, 128
    %605 = vxpose.xlu0.b32.cont [4/16] 0.0, 128
    %606 = vxpose.xlu0.b32.cont [5/16] 0.0, 128
    %607 = vxpose.xlu0.b32.cont [6/16] 0.0, 128
    %608 = vxpose.xlu0.b32.cont [7/16] 0.0, 128
    %609 = vxpose.xlu0.b32.cont [8/16] 0.0, 128
    %610 = vxpose.xlu0.b32.cont [9/16] 0.0, 128
    %611 = vxpose.xlu0.b32.cont [10/16] 0.0, 128
    %612 = vxpose.xlu0.b32.cont [11/16] 0.0, 128
    %613 = vxpose.xlu0.b32.cont [12/16] 0.0, 128
    %614 = vxpose.xlu0.b32.cont [13/16] 0.0, 128
    %615 = vxpose.xlu0.b32.cont [14/16] 0.0, 128
    %616 = vxpose.xlu0.b32.cont [15/16] 0.0, 128
    %617 = vxpose.xlu0.b32.end [16/16] 0.0, 128
    %v618 = vpop.trf.xlu0
    %v619 = vpop.trf.xlu0
    %v620 = vpop.trf.xlu0
    %v621 = vpop.trf.xlu0
    %v622 = vpop.trf.xlu0
    %v623 = vpop.trf.xlu0
    %v624 = vpop.trf.xlu0
    %v625 = vpop.trf.xlu0
    %v626 = vpop.trf.xlu0
    %v627 = vpop.trf.xlu0
    %v628 = vpop.trf.xlu0
    %v629 = vpop.trf.xlu0
    %v630 = vpop.trf.xlu0
    %v631 = vpop.trf.xlu0
    %v632 = vpop.trf.xlu0
    %v633 = vpop.trf.xlu0
    %634 = vxpose.xlu0.b32.start [1/16] %v600, 128
    %635 = vxpose.xlu0.b32.cont [2/16] 0.0, 128
    %636 = vxpose.xlu0.b32.cont [3/16] 0.0, 128
    %637 = vxpose.xlu0.b32.cont [4/16] 0.0, 128
    %638 = vxpose.xlu0.b32.cont [5/16] 0.0, 128
    %639 = vxpose.xlu0.b32.cont [6/16] 0.0, 128
    %640 = vxpose.xlu0.b32.cont [7/16] 0.0, 128
    %641 = vxpose.xlu0.b32.cont [8/16] 0.0, 128
    %642 = vxpose.xlu0.b32.cont [9/16] 0.0, 128
    %643 = vxpose.xlu0.b32.cont [10/16] 0.0, 128
    %644 = vxpose.xlu0.b32.cont [11/16] 0.0, 128
    %645 = vxpose.xlu0.b32.cont [12/16] 0.0, 128
    %646 = vxpose.xlu0.b32.cont [13/16] 0.0, 128
    %647 = vxpose.xlu0.b32.cont [14/16] 0.0, 128
    %648 = vxpose.xlu0.b32.cont [15/16] 0.0, 128
    %649 = vxpose.xlu0.b32.end [16/16] 0.0, 128
    %v650 = vpop.trf.xlu0
    %v651 = vpop.trf.xlu0
    %v652 = vpop.trf.xlu0
    %v653 = vpop.trf.xlu0
    %v654 = vpop.trf.xlu0
    %v655 = vpop.trf.xlu0
    %v656 = vpop.trf.xlu0
    %v657 = vpop.trf.xlu0
    %v658 = vpop.trf.xlu0
    %v659 = vpop.trf.xlu0
    %v660 = vpop.trf.xlu0
    %v661 = vpop.trf.xlu0
    %v662 = vpop.trf.xlu0
    %v663 = vpop.trf.xlu0
    %v664 = vpop.trf.xlu0
    %v665 = vpop.trf.xlu0
    %v666 = vmax.f32 %v618, 0.0
    %v667 = vmax.f32 %v650, 0.0
    %v668 = vmin.f32 %v666, 1.0
    %v669 = vmin.f32 %v667, 1.0
    %v670 = vsub.f32 %v440, %v668
    %v671 = vsub.f32 %v441, %v669
    %v672 = vand.u32 2147483647, %v670
    %v673 = vand.u32 2147483647, %v671
    %vm674 = vcmask 27648
    %v675 = vsel %vm674, %v672, 0.0
    %v676 = vsel %vm674, %v673, 0.0
    %v677 = vadd.f32 %v675, %v676
    %678 = vadd.xlane.f32.xlu0 %v677
    %v679 = vpop.xlane.xlu0 %678
    %v680 = vrot.slane %v679, 4
    %v681 = vadd.f32 %v679, %v680
    %v682 = vrot.slane %v681, 2
    %v683 = vadd.f32 %v681, %v682
    %v684 = vrot.slane %v683, 1
    %v685 = vadd.f32 %v683, %v684
    %s686 = vtos %v685
    %s687 = smul.f32 %s686, 0.025
    %s688 = sadd.f32 %s439, %s687
    %v689 = vld [vmem:[#allocation7] sm:$0xff]
    %v690 = vld [vmem:[#allocation7 + $0x8] sm:$0xff]
    %v691 = vld [vmem:[%s8] sm:$0xff]
    %v692 = vld [vmem:[%s8 + $0x8] sm:$0xff]
    %693 = vrot.lane.b32.xlu0 %v174, 122
    %v694 = vpop.permute.xlu0 %693
    %695 = vrot.lane.b32.xlu0 %v179, 122
    %v696 = vpop.permute.xlu0 %695
    %697 = vrot.lane.b32.xlu0 %v184, 122
    %v698 = vpop.permute.xlu0 %697
    %699 = vrot.lane.b32.xlu0 %v189, 122
    %v700 = vpop.permute.xlu0 %699
    %705 = vxpose.xlu0.b32.start [1/16] %v694, 128
    %706 = vxpose.xlu0.b32.cont [2/16] %v696, 128
    %707 = vxpose.xlu0.b32.cont [3/16] 0.0, 128
    %708 = vxpose.xlu0.b32.cont [4/16] 0.0, 128
    %709 = vxpose.xlu0.b32.cont [5/16] 0.0, 128
    %710 = vxpose.xlu0.b32.cont [6/16] 0.0, 128
    %711 = vxpose.xlu0.b32.cont [7/16] 0.0, 128
    %712 = vxpose.xlu0.b32.cont [8/16] 0.0, 128
    %713 = vxpose.xlu0.b32.cont [9/16] 0.0, 128
    %714 = vxpose.xlu0.b32.cont [10/16] 0.0, 128
    %715 = vxpose.xlu0.b32.cont [11/16] 0.0, 128
    %716 = vxpose.xlu0.b32.cont [12/16] 0.0, 128
    %717 = vxpose.xlu0.b32.cont [13/16] 0.0, 128
    %718 = vxpose.xlu0.b32.cont [14/16] 0.0, 128
    %719 = vxpose.xlu0.b32.cont [15/16] 0.0, 128
    %720 = vxpose.xlu0.b32.end [16/16] 0.0, 128
    %v721 = vpop.trf.xlu0
    %v722 = vpop.trf.xlu0
    %v723 = vpop.trf.xlu0
    %v724 = vpop.trf.xlu0
    %v725 = vpop.trf.xlu0
    %v726 = vpop.trf.xlu0
    %v727 = vpop.trf.xlu0
    %v728 = vpop.trf.xlu0
    %v729 = vpop.trf.xlu0
    %v730 = vpop.trf.xlu0
    %v731 = vpop.trf.xlu0
    %v732 = vpop.trf.xlu0
    %v733 = vpop.trf.xlu0
    %v734 = vpop.trf.xlu0
    %v735 = vpop.trf.xlu0
    %v736 = vpop.trf.xlu0
    %737 = vxpose.xlu0.b32.start [1/16] %v698, 128
    %738 = vxpose.xlu0.b32.cont [2/16] %v700, 128
    %739 = vxpose.xlu0.b32.cont [3/16] 0.0, 128
    %740 = vxpose.xlu0.b32.cont [4/16] 0.0, 128
    %741 = vxpose.xlu0.b32.cont [5/16] 0.0, 128
    %742 = vxpose.xlu0.b32.cont [6/16] 0.0, 128
    %743 = vxpose.xlu0.b32.cont [7/16] 0.0, 128
    %744 = vxpose.xlu0.b32.cont [8/16] 0.0, 128
    %745 = vxpose.xlu0.b32.cont [9/16] 0.0, 128
    %746 = vxpose.xlu0.b32.cont [10/16] 0.0, 128
    %747 = vxpose.xlu0.b32.cont [11/16] 0.0, 128
    %748 = vxpose.xlu0.b32.cont [12/16] 0.0, 128
    %749 = vxpose.xlu0.b32.cont [13/16] 0.0, 128
    %750 = vxpose.xlu0.b32.cont [14/16] 0.0, 128
    %751 = vxpose.xlu0.b32.cont [15/16] 0.0, 128
    %752 = vxpose.xlu0.b32.end [16/16] 0.0, 128
    %v753 = vpop.trf.xlu0
    %v754 = vpop.trf.xlu0
    %v755 = vpop.trf.xlu0
    %v756 = vpop.trf.xlu0
    %v757 = vpop.trf.xlu0
    %v758 = vpop.trf.xlu0
    %v759 = vpop.trf.xlu0
    %v760 = vpop.trf.xlu0
    %v761 = vpop.trf.xlu0
    %v762 = vpop.trf.xlu0
    %v763 = vpop.trf.xlu0
    %v764 = vpop.trf.xlu0
    %v765 = vpop.trf.xlu0
    %v766 = vpop.trf.xlu0
    %v767 = vpop.trf.xlu0
    %v768 = vpop.trf.xlu0
    %v770 = vsel %vm94, %v721, 0
    %v773 = vsel %vm94, %v753, 0
    %775 = vmatprep.subr.mxu0 0.0
    %776 = vmatpush1.msra.mxu0 0.0
    %777 = vmatprep.subr.mxu0 0.0
    %778 = vmatpush1.msra.mxu0 0.0
    %779 = vmatprep.subr.mxu0 0.0
    %780 = vmatpush1.msra.mxu0 0.0
    %781 = vmatprep.subr.mxu0 0.0
    %782 = vmatpush1.msra.mxu0 0.0
    %783 = vmatprep.subr.mxu0 0.0
    %784 = vmatpush1.msra.mxu0 0.0
    %785 = vmatprep.subr.mxu0 0.0
    %786 = vmatpush1.msra.mxu0 0.0
    %787 = vmatprep.subr.mxu0 0.0
    %788 = vmatpush1.msra.mxu0 0.0
    %789 = vmatprep.subr.mxu0 0.0
    %790 = vmatpush1.msra.mxu0 0.0
    %791 = vmatprep.subr.mxu0 0.0
    %792 = vmatpush1.msra.mxu0 0.0
    %793 = vmatprep.subr.mxu0 0.0
    %794 = vmatpush1.msra.mxu0 0.0
    %795 = vmatprep.subr.mxu0 0.0
    %796 = vmatpush1.msra.mxu0 0.0
    %797 = vmatprep.subr.mxu0 0.0
    %798 = vmatpush1.msra.mxu0 0.0
    %799 = vmatprep.subr.mxu0 0.0
    %800 = vmatpush1.msra.mxu0 0.0
    %801 = vmatprep.subr.mxu0 0.0
    %802 = vmatpush1.msra.mxu0 0.0
    %803 = vmatprep.subr.mxu0 0.0
    %804 = vmatpush1.msra.mxu0 %v692
    %805 = vmatprep.subr.mxu0 0.0
    %806 = vmatpush1.msra.mxu0 %v691
    %807 = vmatprep.subr.mxu0 0.0
    %808 = vmatpush2.msra.mxu0 0.0
    %809 = vmatprep.subr.mxu0 0.0
    %810 = vmatpush2.msra.mxu0 0.0
    %811 = vmatprep.subr.mxu0 0.0
    %812 = vmatpush2.msra.mxu0 0.0
    %813 = vmatprep.subr.mxu0 0.0
    %814 = vmatpush2.msra.mxu0 0.0
    %815 = vmatprep.subr.mxu0 0.0
    %816 = vmatpush2.msra.mxu0 0.0
    %817 = vmatprep.subr.mxu0 0.0
    %818 = vmatpush2.msra.mxu0 0.0
    %819 = vmatprep.subr.mxu0 0.0
    %820 = vmatpush2.msra.mxu0 0.0
    %821 = vmatprep.subr.mxu0 0.0
    %822 = vmatpush2.msra.mxu0 0.0
    %823 = vmatprep.subr.mxu0 0.0
    %824 = vmatpush2.msra.mxu0 0.0
    %825 = vmatprep.subr.mxu0 0.0
    %826 = vmatpush2.msra.mxu0 0.0
    %827 = vmatprep.subr.mxu0 0.0
    %828 = vmatpush2.msra.mxu0 0.0
    %829 = vmatprep.subr.mxu0 0.0
    %830 = vmatpush2.msra.mxu0 0.0
    %831 = vmatprep.subr.mxu0 0.0
    %832 = vmatpush2.msra.mxu0 0.0
    %833 = vmatprep.subr.mxu0 0.0
    %834 = vmatpush2.msra.mxu0 0.0
    %835 = vmatprep.subr.mxu0 0.0
    %836 = vmatpush2.msra.mxu0 0.0
    %837 = vmatprep.subr.mxu0 0.0
    %838 = vmatpush2.msra.mxu0 0.0
    %839 = vmatprep.mubr.f32.mxu0 0.0
    %840 = vmatmul.mubr.f32.gmra.mxu0 %v770
    %v841 = vpop.f32.mrf.mxu0
    %v842 = vadd.f32 0.0, %v841
    %v843 = vpop.f32.mrf.mxu0
    %844 = vmatprep.mubr.f32.mxu0 0.0
    %845 = vmatmul.mubr.f32.gmra.mxu0 %v773
    %v846 = vpop.f32.mrf.mxu0
    %v847 = vadd.f32 0.0, %v846
    %v848 = vpop.f32.mrf.mxu0
    %849 = vdwg.mxu0
    %850 = vxpose.xlu0.b32.start [1/16] %v842, 128
    %851 = vxpose.xlu0.b32.cont [2/16] 0.0, 128
    %852 = vxpose.xlu0.b32.cont [3/16] 0.0, 128
    %853 = vxpose.xlu0.b32.cont [4/16] 0.0, 128
    %854 = vxpose.xlu0.b32.cont [5/16] 0.0, 128
    %855 = vxpose.xlu0.b32.cont [6/16] 0.0, 128
    %856 = vxpose.xlu0.b32.cont [7/16] 0.0, 128
    %857 = vxpose.xlu0.b32.cont [8/16] 0.0, 128
    %858 = vxpose.xlu0.b32.cont [9/16] 0.0, 128
    %859 = vxpose.xlu0.b32.cont [10/16] 0.0, 128
    %860 = vxpose.xlu0.b32.cont [11/16] 0.0, 128
    %861 = vxpose.xlu0.b32.cont [12/16] 0.0, 128
    %862 = vxpose.xlu0.b32.cont [13/16] 0.0, 128
    %863 = vxpose.xlu0.b32.cont [14/16] 0.0, 128
    %864 = vxpose.xlu0.b32.cont [15/16] 0.0, 128
    %865 = vxpose.xlu0.b32.end [16/16] 0.0, 128
    %v866 = vpop.trf.xlu0
    %v867 = vpop.trf.xlu0
    %v868 = vpop.trf.xlu0
    %v869 = vpop.trf.xlu0
    %v870 = vpop.trf.xlu0
    %v871 = vpop.trf.xlu0
    %v872 = vpop.trf.xlu0
    %v873 = vpop.trf.xlu0
    %v874 = vpop.trf.xlu0
    %v875 = vpop.trf.xlu0
    %v876 = vpop.trf.xlu0
    %v877 = vpop.trf.xlu0
    %v878 = vpop.trf.xlu0
    %v879 = vpop.trf.xlu0
    %v880 = vpop.trf.xlu0
    %v881 = vpop.trf.xlu0
    %882 = vxpose.xlu0.b32.start [1/16] %v847, 128
    %883 = vxpose.xlu0.b32.cont [2/16] 0.0, 128
    %884 = vxpose.xlu0.b32.cont [3/16] 0.0, 128
    %885 = vxpose.xlu0.b32.cont [4/16] 0.0, 128
    %886 = vxpose.xlu0.b32.cont [5/16] 0.0, 128
    %887 = vxpose.xlu0.b32.cont [6/16] 0.0, 128
    %888 = vxpose.xlu0.b32.cont [7/16] 0.0, 128
    %889 = vxpose.xlu0.b32.cont [8/16] 0.0, 128
    %890 = vxpose.xlu0.b32.cont [9/16] 0.0, 128
    %891 = vxpose.xlu0.b32.cont [10/16] 0.0, 128
    %892 = vxpose.xlu0.b32.cont [11/16] 0.0, 128
    %893 = vxpose.xlu0.b32.cont [12/16] 0.0, 128
    %894 = vxpose.xlu0.b32.cont [13/16] 0.0, 128
    %895 = vxpose.xlu0.b32.cont [14/16] 0.0, 128
    %896 = vxpose.xlu0.b32.cont [15/16] 0.0, 128
    %897 = vxpose.xlu0.b32.end [16/16] 0.0, 128
    %v898 = vpop.trf.xlu0
    %v899 = vpop.trf.xlu0
    %v900 = vpop.trf.xlu0
    %v901 = vpop.trf.xlu0
    %v902 = vpop.trf.xlu0
    %v903 = vpop.trf.xlu0
    %v904 = vpop.trf.xlu0
    %v905 = vpop.trf.xlu0
    %v906 = vpop.trf.xlu0
    %v907 = vpop.trf.xlu0
    %v908 = vpop.trf.xlu0
    %v909 = vpop.trf.xlu0
    %v910 = vpop.trf.xlu0
    %v911 = vpop.trf.xlu0
    %v912 = vpop.trf.xlu0
    %v913 = vpop.trf.xlu0
    %v914 = vmax.f32 %v866, 0.0
    %v915 = vmax.f32 %v898, 0.0
    %v916 = vmin.f32 %v914, 1.0
    %v917 = vmin.f32 %v915, 1.0
    %v918 = vsub.f32 %v689, %v916
    %v919 = vsub.f32 %v690, %v917
    %v920 = vand.u32 2147483647, %v918
    %v921 = vand.u32 2147483647, %v919
    %vm922 = vcmask 64512
    %v923 = vsel %vm922, %v920, 0.0
    %v924 = vsel %vm922, %v921, 0.0
    %v925 = vadd.f32 %v923, %v924
    %926 = vadd.xlane.f32.xlu0 %v925
    %v927 = vpop.xlane.xlu0 %926
    %v928 = vrot.slane %v927, 4
    %v929 = vadd.f32 %v927, %v928
    %v930 = vrot.slane %v929, 2
    %v931 = vadd.f32 %v929, %v930
    %v932 = vrot.slane %v931, 1
    %v933 = vadd.f32 %v931, %v932
    %s934 = vtos %v933
    %s935 = smul.f32 %s934, 0.0078125
    %s936 = sadd.f32 %s688, %s935
    %v937 = vld [vmem:[%s4] sm:$0xff]
    %v938 = vld [vmem:[%s4 + $0x8] sm:$0xff]
    %v939 = vld [vmem:[%s4 + $0x10] sm:$0xff]
    %v940 = vld [vmem:[%s4 + $0x18] sm:$0xff]
    %v941 = vmax.f32 %v88, 0.0
    %v942 = vmax.f32 %v89, 0.0
    %v943 = vmax.f32 %v90, 0.0
    %v944 = vmax.f32 %v91, 0.0
    %v945 = vmin.f32 %v941, 1.0
    %v946 = vmin.f32 %v942, 1.0
    %v947 = vmin.f32 %v943, 1.0
    %v948 = vmin.f32 %v944, 1.0
    %v949 = vsub.f32 %v937, %v945
    %v950 = vsub.f32 %v938, %v946
    %v951 = vsub.f32 %v939, %v947
    %v952 = vsub.f32 %v940, %v948
    %v953 = vand.u32 2147483647, %v949
    %v954 = vand.u32 2147483647, %v950
    %v955 = vand.u32 2147483647, %v951
    %v956 = vand.u32 2147483647, %v952
    %v957 = vsel %vm94, %v953, 0.0
    %v958 = vsel %vm94, %v954, 0.0
    %v959 = vadd.f32 %v957, %v958
    %v960 = vsel %vm94, %v955, 0.0
    %v961 = vadd.f32 %v959, %v960
    %v962 = vsel %vm94, %v956, 0.0
    %v963 = vadd.f32 %v961, %v962
    %964 = vadd.xlane.f32.xlu0 %v963
    %v965 = vpop.xlane.xlu0 %964
    %v966 = vrot.slane %v965, 4
    %v967 = vadd.f32 %v965, %v966
    %v968 = vrot.slane %v967, 2
    %v969 = vadd.f32 %v967, %v968
    %v970 = vrot.slane %v969, 1
    %v971 = vadd.f32 %v969, %v970
    %s972 = vtos %v971
    %s973 = smul.f32 %s972, 0.001953125
    %s974 = sadd.f32 %s936, %s973
    %s975 = scalar_lea.smem [#allocation10], 0
    %976 = sst [smem:[%s975]] %s974
    // Predicated region
    $region54: #{tpu_custom_call.1} parent=1 // pred_check
      _
    $region55: #{tpu_custom_call.1} parent=1 // pred_check_branch
      %978 = sbr.rel (0) target = $region57
    $region56: #{tpu_custom_call.1} parent=1 // pred_region
      %s980 = ssub.s32 16, 16
      %981 = vsyncadd [#allocation4], %s980
      %984 = dma.smem_to_hbm [#allocation10], 16, %s9, [#allocation4]
    $region57: #{tpu_custom_call.1} parent=1 // pred_fallthru
      _
    // Predicated region
    $region58: #{tpu_custom_call.1} parent=1 // pred_check
      _
    $region59: #{tpu_custom_call.1} parent=1 // pred_check_branch
      %986 = sbr.rel (0) target = $region61
    $region60: #{tpu_custom_call.1} parent=1 // pred_region
      %987 = dma.done [#allocation4], 16
    $region61: #{tpu_custom_call.1} parent=1 // pred_fallthru
      _
    %988 = sfence
    %989 = vsyncpa [#allocation3], 1
    %990 = vsyncpa [#allocation6], 1
    %991 = vsyncpa [#allocation9], 1
    %992 = vsyncpa [#allocation4], 1

</llo_original>
